<compile_context>
chip_gen: v6e
topology: v6e:2x2x1
jax: 0.10.0
libtpu: 0.0.40
codegen_flags: <defaults>
</compile_context>

<pallas_src>
import jax
import jax.numpy as jnp
from jax.experimental import pallas as pl
from jax.experimental.pallas import tpu as pltpu


# ---------------------------------------------------------------------------
# Primary path: zero-traffic identity via input/output aliasing.
# ---------------------------------------------------------------------------
def _skip_alias_kernel(x_hbm_ref, o_hbm_ref):
    # NOTE(correctness): the output is valid *only* because
    # input_output_aliases={0: 0} makes o_hbm_ref the same HBM buffer as
    # x_hbm_ref.  Do not remove the alias without adding a real copy here.
    del x_hbm_ref, o_hbm_ref


def skip(x: jax.Array) -> jax.Array:
    """Skip.forward(x) -> x, as a Pallas call whose output aliases its input.

    Zero HBM traffic only if the caller donates the input buffer
    (e.g. `jax.jit(skip, donate_argnums=0)` or the value is dead afterwards);
    otherwise XLA inserts a defensive HBM copy *before* the custom call.
    """
    return pl.pallas_call(
        _skip_alias_kernel,
        out_shape=jax.ShapeDtypeStruct(x.shape, x.dtype),
        in_specs=[pl.BlockSpec(memory_space=pl.ANY)],
        out_specs=pl.BlockSpec(memory_space=pl.ANY),
        input_output_aliases={0: 0},
    )(x)


# Donating wrapper: the form call sites should use when they no longer need
# the input buffer — this is what actually yields the zero-copy identity.
skip_donated = jax.jit(skip, donate_argnums=0)


# ---------------------------------------------------------------------------
# Secondary path: identity into a *distinct* buffer (streaming tiled copy).
# ---------------------------------------------------------------------------
def _copy_kernel(x_ref, o_ref):
    o_ref[...] = x_ref[...]


# ~4 MiB per block: double-buffered in + out => <=16 MiB VMEM, safe on v7x
# (32 MiB scoped default, 64 MiB physical) and big enough to amortize the
# ~0.35 us per-grid-step overhead on v5e/v6e.
_BLOCK_BYTES = 4 * 1024 * 1024
_LANE_CANDIDATES = (1024, 512, 256, 128)  # lane-dense widths (multiples of 128)


def _round_down_mult(v: int, m: int) -> int:
    return (v // m) * m


def _round_up_mult(v: int, m: int) -> int:
    return ((v + m - 1) // m) * m


def _pick_block_rows(rows: int, row_bytes: int) -> int:
    """Rows per block: multiple of 8 (or == rows), <= ~_BLOCK_BYTES,
    and >=2 grid steps whenever that is cheap (v7x 2-TC sharding)."""
    target = max(8, _round_down_mult(_BLOCK_BYTES // row_bytes, 8))
    if rows > target:
        return target  # many steps; ragged last block is masked by Pallas
    if rows >= 16:
        # Fits in one block, but split so the "parallel" grid has >=2 steps.
        half = _round_up_mult((rows + 1) // 2, 8)  # multiple of 8, < rows
        return min(half, target)
    return rows  # tiny input: single full-dim block


def _tiled_copy_2d(flat: jax.Array) -> jax.Array:
    rows, lanes = flat.shape
    block_rows = _pick_block_rows(rows, lanes * flat.dtype.itemsize)
    return pl.pallas_call(
        _copy_kernel,
        out_shape=jax.ShapeDtypeStruct(flat.shape, flat.dtype),
        grid=(pl.cdiv(rows, block_rows),),
        in_specs=[pl.BlockSpec((block_rows, lanes), lambda i: (i, 0))],
        out_specs=pl.BlockSpec((block_rows, lanes), lambda i: (i, 0)),
        compiler_params=pltpu.CompilerParams(
            dimension_semantics=("parallel",),
        ),
    )(flat)


def _tiled_copy_1d(flat: jax.Array) -> jax.Array:
    (total,) = flat.shape
    target = max(1024, _round_down_mult(_BLOCK_BYTES // flat.dtype.itemsize, 1024))
    block = target if total > target else total  # partial blocks are multiples of 1024
    return pl.pallas_call(
        _copy_kernel,
        out_shape=jax.ShapeDtypeStruct(flat.shape, flat.dtype),
        grid=(pl.cdiv(total, block),),
        in_specs=[pl.BlockSpec((block,), lambda i: (i,))],
        out_specs=pl.BlockSpec((block,), lambda i: (i,)),
        compiler_params=pltpu.CompilerParams(
            dimension_semantics=("parallel",),
        ),
    )(flat)


def skip_copy(x: jax.Array) -> jax.Array:
    """Identity that materializes a distinct output buffer (streaming copy)."""
    total = x.size
    if total == 0:
        return jnp.copy(x)

    for lanes in _LANE_CANDIDATES:
        if total % lanes == 0:
            flat = x.reshape(total // lanes, lanes)
            return _tiled_copy_2d(flat).reshape(x.shape)

    # Element count not a multiple of 128: stream a flat 1-D view; the ragged
    # last block is masked by Pallas, blocks stay bounded at ~4 MiB.
    return _tiled_copy_1d(x.reshape(total)).reshape(x.shape)


if __name__ == "__main__":
    key = jax.random.PRNGKey(0)
    x = jax.random.normal(key, (2, 4, 16, 16), dtype=jnp.float32)

    # 1) Aliased identity without donation (correct; XLA may add a pre-copy).
    y = skip(x)
    jax.block_until_ready(y)
    assert y.shape == x.shape and y.dtype == x.dtype
    assert bool(jnp.array_equal(y, x))

    # 2) Aliased identity with a *donated* input buffer: the intended
    #    zero-HBM-traffic path.  Donate a fresh copy so `x` stays valid.
    z = skip_donated(jnp.copy(x))
    jax.block_until_ready(z)
    assert z.shape == x.shape and z.dtype == x.dtype
    assert bool(jnp.array_equal(z, x))

    # 3) Distinct-buffer streaming copy variant.
    w = skip_copy(x)
    jax.block_until_ready(w)
    assert w.shape == x.shape and w.dtype == x.dtype
    assert bool(jnp.array_equal(w, x))

    print("KERNEL_OK")
</pallas_src>

<mosaic_0001>
module attributes {stable_mosaic.version = 11 : i64} {
  func.func @_skip_alias_kernel(%arg0: memref<2x4x16x16xf32, #tpu.memory_space<any>>, %arg1: memref<2x4x16x16xf32, #tpu.memory_space<any>>) attributes {dimension_semantics = [], scalar_prefetch = 0 : i64, scratch_operands = 0 : i64, tpu.core_type = #tpu.core_type<tc>} {
    return
  }
}

</mosaic_0001>

<llo_original>
// kernel: tpu_custom_call.1
$region0: #{tpu_custom_call.1}
  #allocation0 [shape = 'u32[]', space=smem, size = 0x4, offset = 0x4, fixed_abs, tag = 'smem constant byte address 0x4 - core index']
  #allocation1 [shape = 'u32[144,128]{1,0:T(1,128)}', space=vmem, size = 0x12000, scoped, tag = 'internal scratch']
  %s0 = inlined_call_operand.hbm [shape: f32[2,4,16,16], index: 0, kind: input, shape index: {}, may-alias: {0,1}]
  %s1 = inlined_call_operand.hbm [shape: f32[2,4,16,16], index: 1, kind: output, shape index: {}, may-alias: {0,1}]
  %s2 = sld [smem:[#allocation0]]
  $region2: #{tpu_custom_call.1} parent=0
    _
  %s4 = ssub.s32 1, %s2
  %s5 = scalar_select 0, %s4, %s2

</llo_original>
